<compile_context>
chip_gen: v5e
topology: v5e:2x2
jax: 0.10.0
libtpu: 0.0.40
codegen_flags: <defaults>
</compile_context>

<pallas_src>
import functools

import jax
import jax.numpy as jnp
from jax.experimental import pallas as pl
from jax.experimental.pallas import tpu as pltpu


def _round_up(x, m):
    return ((x + m - 1) // m) * m


def fcn_kernel(x_ref, w1_ref, b1_ref, w2_ref, b2_ref, o_ref):
    # In-kernel cast of the raw f32 activation tile to bf16 for the MXU.
    x = x_ref[...].astype(w1_ref.dtype)
    # Hidden layer: (tile_b, 625) @ (625, 512) -> f32 accumulation, + f32 bias.
    h = jnp.dot(x, w1_ref[...], preferred_element_type=jnp.float32)
    h = h + b1_ref[...]
    # Dropout(0.5) == identity in eval mode.
    # Output layer: (tile_b, 512) @ (512, N_pad) -> f32 accumulation, + f32 bias.
    out = jnp.dot(h.astype(w2_ref.dtype), w2_ref[...],
                  preferred_element_type=jnp.float32)
    out = out + b2_ref[...]
    o_ref[...] = out.astype(o_ref.dtype)


def prepare_params(w1, b1, w2, b2, compute_dtype=jnp.bfloat16):
    """One-time param prep (call once, outside the per-forward path).

    w1: (625, 512), w2: (512, n_classes) stored pre-transposed as (in, out).
    Weights are cast to bf16; the logits dim is zero-padded to a multiple of
    128 so the second matmul and output store are lane-dense. Biases stay f32.
    """
    n_classes = w2.shape[1]
    n_pad = _round_up(max(n_classes, 128), 128)
    w1p = w1.astype(compute_dtype)                                  # (625, 512)
    b1p = b1.reshape(1, -1).astype(jnp.float32)                     # (1, 512)
    w2p = jnp.pad(w2.astype(compute_dtype),
                  ((0, 0), (0, n_pad - n_classes)))                 # (512, N_pad)
    b2p = jnp.pad(b2.reshape(1, -1).astype(jnp.float32),
                  ((0, 0), (0, n_pad - n_classes)))                 # (1, N_pad)
    return w1p, b1p, w2p, b2p


@functools.partial(jax.jit, static_argnames=("n_classes", "tile_b"))
def base_fcn_high(x, w1p, b1p, w2p, b2p, *, n_classes, tile_b=512):
    """x: (B, 1, 25, 25) float32 NCHW. Params from prepare_params().
    Returns logits (B, n_classes) float32 (eval-mode forward).
    bf16 matmuls with f32 accumulation: small precision delta vs f32 PyTorch."""
    B = x.shape[0]
    xf = x.reshape(B, -1)                       # Flatten -> (B, 625), raw f32
    K = xf.shape[1]                             # 625
    H = w1p.shape[1]                            # 512
    n_pad = w2p.shape[1]                        # padded logits dim (>=128, 128-mult)

    # Batch tile: multiple of 8 sublanes; keep >= 2 grid blocks at large B so the
    # "parallel" axis can shard across v7x's two TensorCores; shrink for tiny B.
    tile_b = max(8, min(tile_b, _round_up(pl.cdiv(B, 2), 8)))
    num_blocks = pl.cdiv(B, tile_b)             # ragged tail block handled by Pallas

    flops = 2 * B * K * H + 2 * B * H * n_pad
    bytes_accessed = (xf.size * 4 + w1p.size * 2 + w2p.size * 2
                      + b1p.size * 4 + b2p.size * 4 + B * n_pad * 4)

    out = pl.pallas_call(
        fcn_kernel,
        out_shape=jax.ShapeDtypeStruct((B, n_pad), jnp.float32),
        grid_spec=pltpu.PrefetchScalarGridSpec(
            num_scalar_prefetch=0,
            grid=(num_blocks,),
            in_specs=[
                pl.BlockSpec((tile_b, K), lambda i: (i, 0)),   # x tile streams (raw f32)
                pl.BlockSpec((K, H), lambda i: (0, 0)),        # w1 resident (bf16)
                pl.BlockSpec((1, H), lambda i: (0, 0)),        # b1 resident (f32)
                pl.BlockSpec((H, n_pad), lambda i: (0, 0)),    # w2 resident (bf16)
                pl.BlockSpec((1, n_pad), lambda i: (0, 0)),    # b2 resident (f32)
            ],
            out_specs=pl.BlockSpec((tile_b, n_pad), lambda i: (i, 0)),
        ),
        compiler_params=pltpu.CompilerParams(
            dimension_semantics=("parallel",),
        ),
        cost_estimate=pl.CostEstimate(
            flops=flops, transcendentals=0, bytes_accessed=bytes_accessed),
    )(xf, w1p, b1p, w2p, b2p)

    # Strip logit padding (batch dim is already exact).
    return out[:, :n_classes]


def init_params(key, n_classes):
    """Deterministic init mimicking torch.nn.Linear U(-1/sqrt(fan_in), 1/sqrt(fan_in)).
    Weights stored pre-transposed as (in_features, out_features)."""
    k1, k2, k3, k4 = jax.random.split(key, 4)
    bound1 = 1.0 / jnp.sqrt(625.0)
    bound2 = 1.0 / jnp.sqrt(512.0)
    w1 = jax.random.uniform(k1, (625, 512), jnp.float32, -bound1, bound1)
    b1 = jax.random.uniform(k2, (512,), jnp.float32, -bound1, bound1)
    w2 = jax.random.uniform(k3, (512, n_classes), jnp.float32, -bound2, bound2)
    b2 = jax.random.uniform(k4, (n_classes,), jnp.float32, -bound2, bound2)
    return w1, b1, w2, b2


if __name__ == "__main__":
    key = jax.random.PRNGKey(0)
    kx, kp = jax.random.split(key)

    B, n_classes = 2, 10
    x = jax.random.normal(kx, (B, 1, 25, 25), jnp.float32)   # NCHW -> 625 features
    w1, b1, w2, b2 = init_params(kp, n_classes)

    # One-time param prep (bf16 cast + lane padding) outside the per-call path.
    params = prepare_params(w1, b1, w2, b2)

    out = jax.block_until_ready(base_fcn_high(x, *params, n_classes=n_classes))

    # Plain-JAX f32 reference (eval-mode forward). bf16 compute -> relaxed tol.
    xf = x.reshape(B, -1)
    ref = (xf @ w1 + b1) @ w2 + b2
    assert out.shape == (B, n_classes)
    assert jnp.allclose(out, ref, atol=5e-2, rtol=5e-2), "mismatch vs reference"

    print("KERNEL_OK")
</pallas_src>

<mosaic_0001>
module attributes {stable_mosaic.version = 11 : i64} {
  func.func @fcn_kernel(%arg0: i32, %arg1: memref<8x625xf32, #tpu.memory_space<vmem>>, %arg2: memref<625x512xbf16, #tpu.memory_space<vmem>>, %arg3: memref<1x512xf32, #tpu.memory_space<vmem>>, %arg4: memref<512x128xbf16, #tpu.memory_space<vmem>>, %arg5: memref<1x128xf32, #tpu.memory_space<vmem>>, %arg6: memref<8x128xf32, #tpu.memory_space<vmem>>) attributes {dimension_semantics = [#tpu.dimension_semantics<parallel>], iteration_bounds = array<i64: 1>, scalar_prefetch = 0 : i64, scratch_operands = 0 : i64, tpu.core_type = #tpu.core_type<tc>, window_params = [{transform_indices = @transform_0, window_bounds = array<i64: 8, 625>}, {pipeline_mode = #tpu.pipeline_mode<synchronous>, transform_indices = @transform_1, window_bounds = array<i64: 625, 512>}, {pipeline_mode = #tpu.pipeline_mode<synchronous>, transform_indices = @transform_2, window_bounds = array<i64: 1, 512>}, {pipeline_mode = #tpu.pipeline_mode<synchronous>, transform_indices = @transform_3, window_bounds = array<i64: 512, 128>}, {pipeline_mode = #tpu.pipeline_mode<synchronous>, transform_indices = @transform_4, window_bounds = array<i64: 1, 128>}, {transform_indices = @transform_5, window_bounds = array<i64: 8, 128>}]} {
    %c0 = arith.constant 0 : index
    %c0_0 = arith.constant 0 : index
    %0 = vector.load %arg1[%c0, %c0_0] : memref<8x625xf32, #tpu.memory_space<vmem>>, vector<8x625xf32>
    %1 = arith.truncf %0 : vector<8x625xf32> to vector<8x625xbf16>
    %c0_1 = arith.constant 0 : index
    %c0_2 = arith.constant 0 : index
    %2 = vector.load %arg2[%c0_1, %c0_2] : memref<625x512xbf16, #tpu.memory_space<vmem>>, vector<625x512xbf16>
    %cst = arith.constant dense<0.000000e+00> : vector<8x512xf32>
    %3 = tpu.matmul %1, %2, %cst {dimension_numbers = #tpu.dot_dimension_numbers<[1], [0], [0], [1], [0, 0, 1, 1], [], []>} : vector<8x625xbf16>, vector<625x512xbf16>, vector<8x512xf32> -> vector<8x512xf32>
    %c0_3 = arith.constant 0 : index
    %c0_4 = arith.constant 0 : index
    %4 = vector.load %arg3[%c0_3, %c0_4] : memref<1x512xf32, #tpu.memory_space<vmem>>, vector<1x512xf32>
    %5 = vector.broadcast %4 : vector<1x512xf32> to vector<8x512xf32>
    %6 = arith.addf %3, %5 : vector<8x512xf32>
    %7 = arith.truncf %6 : vector<8x512xf32> to vector<8x512xbf16>
    %c0_5 = arith.constant 0 : index
    %c0_6 = arith.constant 0 : index
    %8 = vector.load %arg4[%c0_5, %c0_6] : memref<512x128xbf16, #tpu.memory_space<vmem>>, vector<512x128xbf16>
    %cst_7 = arith.constant dense<0.000000e+00> : vector<8x128xf32>
    %9 = tpu.matmul %7, %8, %cst_7 {dimension_numbers = #tpu.dot_dimension_numbers<[1], [0], [0], [1], [0, 0, 1, 1], [], []>} : vector<8x512xbf16>, vector<512x128xbf16>, vector<8x128xf32> -> vector<8x128xf32>
    %c0_8 = arith.constant 0 : index
    %c0_9 = arith.constant 0 : index
    %10 = vector.load %arg5[%c0_8, %c0_9] : memref<1x128xf32, #tpu.memory_space<vmem>>, vector<1x128xf32>
    %11 = vector.broadcast %10 : vector<1x128xf32> to vector<8x128xf32>
    %12 = arith.addf %9, %11 : vector<8x128xf32>
    %c0_10 = arith.constant 0 : index
    %c0_11 = arith.constant 0 : index
    %13 = vector.load %arg6[%c0_10, %c0_11] : memref<8x128xf32, #tpu.memory_space<vmem>>, vector<8x128xf32>
    tpu.vector_store %arg6[%c0_10, %c0_11], %12 {strides = array<i32>} : memref<8x128xf32, #tpu.memory_space<vmem>>, vector<8x128xf32>,
    return
  }
  func.func @transform_0(%arg0: i32) -> (i32, i32) {
    %c0_i32 = arith.constant 0 : i32
    %c0_i32_0 = arith.constant 0 : i32
    return %arg0, %c0_i32 : i32, i32
  }
  func.func @transform_1(%arg0: i32) -> (i32, i32) {
    %c0_i32 = arith.constant 0 : i32
    %c0_i32_0 = arith.constant 0 : i32
    %c0_i32_1 = arith.constant 0 : i32
    return %c0_i32, %c0_i32_0 : i32, i32
  }
  func.func @transform_2(%arg0: i32) -> (i32, i32) {
    %c0_i32 = arith.constant 0 : i32
    %c0_i32_0 = arith.constant 0 : i32
    %c0_i32_1 = arith.constant 0 : i32
    return %c0_i32, %c0_i32_0 : i32, i32
  }
  func.func @transform_3(%arg0: i32) -> (i32, i32) {
    %c0_i32 = arith.constant 0 : i32
    %c0_i32_0 = arith.constant 0 : i32
    %c0_i32_1 = arith.constant 0 : i32
    return %c0_i32, %c0_i32_0 : i32, i32
  }
  func.func @transform_4(%arg0: i32) -> (i32, i32) {
    %c0_i32 = arith.constant 0 : i32
    %c0_i32_0 = arith.constant 0 : i32
    %c0_i32_1 = arith.constant 0 : i32
    return %c0_i32, %c0_i32_0 : i32, i32
  }
  func.func @transform_5(%arg0: i32) -> (i32, i32) {
    %c0_i32 = arith.constant 0 : i32
    %c0_i32_0 = arith.constant 0 : i32
    return %arg0, %c0_i32 : i32, i32
  }
}

</mosaic_0001>

<llo_original>
// kernel: base_fcn_high.1
$region0: #{base_fcn_high.1}
  #allocation0 [shape = 'u32[]', space=smem, size = 0x4, offset = 0x4, fixed_abs, tag = 'smem constant byte address 0x4 - core index']
  #allocation1 [shape = 'u32[72,128]{1,0:T(1,128)}', space=vmem, size = 0x9000, scoped, tag = 'internal scratch']
  %s0 = inlined_call_operand.vmem [shape: f32[2,625], index: 0, kind: input, shape index: {}]
  %s1 = inlined_call_operand.hbm [shape: bf16[625,512], index: 1, kind: input, shape index: {}]
  %s2 = inlined_call_operand.vmem [shape: f32[1,512], index: 2, kind: input, shape index: {}]
  %s3 = inlined_call_operand.hbm [shape: bf16[512,128], index: 3, kind: input, shape index: {}]
  %s4 = inlined_call_operand.vmem [shape: f32[1,128], index: 4, kind: input, shape index: {}]
  %s5 = inlined_call_operand.hbm [shape: f32[2,128], index: 5, kind: output, shape index: {}]
  %s6 = sld [smem:[#allocation0]]
  $region38: #{base_fcn_high.1} parent=0
    _
  %s8 = ssub.s32 1, %s6
  %s9 = scalar_select 0, %s8, %s6
  $region1: #{base_fcn_high.1} parent=0
    #allocation2 [shape = 'u8[647168]{0}', space=vmem, size = 0x9e000, scoped, tag = 'input window, operand 1, single buffered']
    #allocation3 [shape = 's32[1]{0}', space=sflag, size = 0x4, scoped, tag = 'scoped memory for base_fcn_high.1']
    #allocation4 [shape = 's32[1]{0}', space=sflag, size = 0x4, scoped, tag = 'scoped memory for base_fcn_high.1']
    #allocation5 [shape = 'u8[131072]{0}', space=vmem, size = 0x20000, scoped, tag = 'input window, operand 3, single buffered']
    #allocation6 [shape = 's32[1]{0}', space=sflag, size = 0x4, scoped, tag = 'scoped memory for base_fcn_high.1']
    #allocation7 [shape = 'u8[4096]{0}', space=vmem, size = 0x1000, scoped, tag = 'output window, operand 0, single buffered']
    %10 = vsyncpa [#allocation3], 0
    %11 = vsyncpa [#allocation6], 0
    %12 = vsyncpa [#allocation4], 0
    // Predicated region
    $region2: #{base_fcn_high.1} parent=1 // pred_check
      _
    $region3: #{base_fcn_high.1} parent=1 // pred_check_branch
      %14 = sbr.rel (0) target = $region5
    $region4: #{base_fcn_high.1} parent=1 // pred_region
      _
    $region5: #{base_fcn_high.1} parent=1 // pred_fallthru
      _
    // Predicated region
    $region6: #{base_fcn_high.1} parent=1 // pred_check
      _
    $region7: #{base_fcn_high.1} parent=1 // pred_check_branch
      %16 = sbr.rel (0) target = $region9
    $region8: #{base_fcn_high.1} parent=1 // pred_region
      %18 = vsyncadd [#allocation3], 0
      %s19 = sshll.u32 %s1, 4
      %s20 = int_to_ptr.hbm [resolvable:$true] %s19
      %s21 = sshll.u32 [#allocation2], 4
      %s22 = int_to_ptr.vmem [resolvable:$true] %s21
      %27 = dma.hbm_to_vmem [thread:$0]  %s20, 20224, %s22, [#allocation3], 256, 256, 16
    $region9: #{base_fcn_high.1} parent=1 // pred_fallthru
      _
    // Predicated region
    $region10: #{base_fcn_high.1} parent=1 // pred_check
      _
    $region11: #{base_fcn_high.1} parent=1 // pred_check_branch
      %29 = sbr.rel (0) target = $region13
    $region12: #{base_fcn_high.1} parent=1 // pred_region
      _
    $region13: #{base_fcn_high.1} parent=1 // pred_fallthru
      _
    // Predicated region
    $region14: #{base_fcn_high.1} parent=1 // pred_check
      _
    $region15: #{base_fcn_high.1} parent=1 // pred_check_branch
      %31 = sbr.rel (0) target = $region17
    $region16: #{base_fcn_high.1} parent=1 // pred_region
      %33 = vsyncadd [#allocation6], 0
      %s34 = sshll.u32 %s3, 4
      %s35 = int_to_ptr.hbm [resolvable:$true] %s34
      %s36 = sshll.u32 [#allocation5], 4
      %s37 = int_to_ptr.vmem [resolvable:$true] %s36
      %42 = dma.hbm_to_vmem [thread:$0]  %s35, 4096, %s37, [#allocation6], 64, 64, 4
    $region17: #{base_fcn_high.1} parent=1 // pred_fallthru
      _
    // Predicated region
    $region18: #{base_fcn_high.1} parent=1 // pred_check
      _
    $region19: #{base_fcn_high.1} parent=1 // pred_check_branch
      %44 = sbr.rel (0) target = $region21
    $region20: #{base_fcn_high.1} parent=1 // pred_region
      _
    $region21: #{base_fcn_high.1} parent=1 // pred_fallthru
      _
    // Predicated region
    $region22: #{base_fcn_high.1} parent=1 // pred_check
      _
    $region23: #{base_fcn_high.1} parent=1 // pred_check_branch
      %46 = sbr.rel (0) target = $region25
    $region24: #{base_fcn_high.1} parent=1 // pred_region
      %48 = dma.done [#allocation3], 20224
    $region25: #{base_fcn_high.1} parent=1 // pred_fallthru
      _
    // Predicated region
    $region26: #{base_fcn_high.1} parent=1 // pred_check
      _
    $region27: #{base_fcn_high.1} parent=1 // pred_check_branch
      %50 = sbr.rel (0) target = $region29
    $region28: #{base_fcn_high.1} parent=1 // pred_region
      %52 = dma.done [#allocation6], 4096
    $region29: #{base_fcn_high.1} parent=1 // pred_fallthru
      _
    %v53 = vld [vmem:[%s0] sm:$0xff]
    %v54 = vld [vmem:[%s0 + $0x8] sm:$0x3]
    %v55 = vld [vmem:[%s0 + $0xa] sm:$0xff]
    %v56 = vld [vmem:[%s0 + $0x12] sm:$0x3]
    %v57 = vld [vmem:[%s0 + $0x14] sm:$0xff]
    %v58 = vld [vmem:[%s0 + $0x1c] sm:$0x3]
    %v59 = vld [vmem:[%s0 + $0x1e] sm:$0xff]
    %v60 = vld [vmem:[%s0 + $0x26] sm:$0x3]
    %69 = vst [vmem:[#allocation1] ss:$4 sm:$0xff] %v53
    %s70 = scalar_lea.vmem [#allocation1], 1
    %71 = vst [vmem:[%s70] ss:$4 sm:$0xff] %v55
    %s72 = scalar_lea.vmem [#allocation1], 2
    %73 = vst [vmem:[%s72] ss:$4 sm:$0xff] %v57
    %s74 = scalar_lea.vmem [#allocation1], 3
    %75 = vst [vmem:[%s74] ss:$4 sm:$0xff] %v59
    %s76 = scalar_lea.vmem [#allocation1], 32
    %77 = vst [vmem:[%s76] ss:$4 sm:$0xff] %v54
    %s78 = scalar_lea.vmem [#allocation1], 33
    %79 = vst [vmem:[%s78] ss:$4 sm:$0xff] %v56
    %s80 = scalar_lea.vmem [#allocation1], 34
    %81 = vst [vmem:[%s80] ss:$4 sm:$0xff] %v58
    %s82 = scalar_lea.vmem [#allocation1], 35
    %83 = vst [vmem:[%s82] ss:$4 sm:$0xff] %v60
    %v84 = vld.sshfl [vmem:[#allocation1] sm:$0xff pattern:$0x73625140]
    %v85 = vld.sshfl [vmem:[#allocation1 + $0x8] sm:$0xff pattern:$0x73625140]
    %v86 = vld.sshfl [vmem:[#allocation1 + $0x10] sm:$0xff pattern:$0x73625140]
    %v87 = vld.sshfl [vmem:[#allocation1 + $0x18] sm:$0xff pattern:$0x73625140]
    %v88 = vld.sshfl [vmem:[#allocation1 + $0x20] sm:$0xff pattern:$0x73625140]
    %v94 = vpack.c.bf16 %v84, %v84
    %v95 = vpack.c.bf16 %v85, %v85
    %v96 = vpack.c.bf16 %v86, %v86
    %v97 = vpack.c.bf16 %v87, %v87
    %v98 = vpack.c.bf16 %v88, %v88
    %v99 = vld [vmem:[#allocation2] sm:$0xff]
    %v100 = vld [vmem:[#allocation2 + $0x8] sm:$0xff]
    %v101 = vld [vmem:[#allocation2 + $0x10] sm:$0xff]
    %v102 = vld [vmem:[#allocation2 + $0x18] sm:$0xff]
    %v103 = vld [vmem:[#allocation2 + $0x20] sm:$0xff]
    %v104 = vld [vmem:[#allocation2 + $0x28] sm:$0xff]
    %v105 = vld [vmem:[#allocation2 + $0x30] sm:$0xff]
    %v106 = vld [vmem:[#allocation2 + $0x38] sm:$0xff]
    %v107 = vld [vmem:[#allocation2 + $0x40] sm:$0xff]
    %v108 = vld [vmem:[#allocation2 + $0x48] sm:$0xff]
    %v109 = vld [vmem:[#allocation2 + $0x50] sm:$0xff]
    %v110 = vld [vmem:[#allocation2 + $0x58] sm:$0xff]
    %v111 = vld [vmem:[#allocation2 + $0x60] sm:$0xff]
    %v112 = vld [vmem:[#allocation2 + $0x68] sm:$0xff]
    %v113 = vld [vmem:[#allocation2 + $0x70] sm:$0xff]
    %v114 = vld [vmem:[#allocation2 + $0x78] sm:$0xff]
    %v115 = vld [vmem:[#allocation2 + $0x80] sm:$0xff]
    %v116 = vld [vmem:[#allocation2 + $0x88] sm:$0xff]
    %v117 = vld [vmem:[#allocation2 + $0x90] sm:$0xff]
    %v118 = vld [vmem:[#allocation2 + $0x98] sm:$0xff]
    %v119 = vld [vmem:[#allocation2 + $0xa0] sm:$0xff]
    %v120 = vld [vmem:[#allocation2 + $0xa8] sm:$0xff]
    %v121 = vld [vmem:[#allocation2 + $0xb0] sm:$0xff]
    %v122 = vld [vmem:[#allocation2 + $0xb8] sm:$0xff]
    %v123 = vld [vmem:[#allocation2 + $0xc0] sm:$0xff]
    %v124 = vld [vmem:[#allocation2 + $0xc8] sm:$0xff]
    %v125 = vld [vmem:[#allocation2 + $0xd0] sm:$0xff]
    %v126 = vld [vmem:[#allocation2 + $0xd8] sm:$0xff]
    %v127 = vld [vmem:[#allocation2 + $0xe0] sm:$0xff]
    %v128 = vld [vmem:[#allocation2 + $0xe8] sm:$0xff]
    %v129 = vld [vmem:[#allocation2 + $0xf0] sm:$0xff]
    %v130 = vld [vmem:[#allocation2 + $0xf8] sm:$0xff]
    %v131 = vld [vmem:[#allocation2 + $0x100] sm:$0xff]
    %v132 = vld [vmem:[#allocation2 + $0x108] sm:$0xff]
    %v133 = vld [vmem:[#allocation2 + $0x110] sm:$0xff]
    %v134 = vld [vmem:[#allocation2 + $0x118] sm:$0xff]
    %v135 = vld [vmem:[#allocation2 + $0x120] sm:$0xff]
    %v136 = vld [vmem:[#allocation2 + $0x128] sm:$0xff]
    %v137 = vld [vmem:[#allocation2 + $0x130] sm:$0xff]
    %v138 = vld [vmem:[#allocation2 + $0x138] sm:$0xff]
    %v139 = vld [vmem:[#allocation2 + $0x140] sm:$0xff]
    %v140 = vld [vmem:[#allocation2 + $0x148] sm:$0xff]
    %v141 = vld [vmem:[#allocation2 + $0x150] sm:$0xff]
    %v142 = vld [vmem:[#allocation2 + $0x158] sm:$0xff]
    %v143 = vld [vmem:[#allocation2 + $0x160] sm:$0xff]
    %v144 = vld [vmem:[#allocation2 + $0x168] sm:$0xff]
    %v145 = vld [vmem:[#allocation2 + $0x170] sm:$0xff]
    %v146 = vld [vmem:[#allocation2 + $0x178] sm:$0xff]
    %v147 = vld [vmem:[#allocation2 + $0x180] sm:$0xff]
    %v148 = vld [vmem:[#allocation2 + $0x188] sm:$0xff]
    %v149 = vld [vmem:[#allocation2 + $0x190] sm:$0xff]
    %v150 = vld [vmem:[#allocation2 + $0x198] sm:$0xff]
    %v151 = vld [vmem:[#allocation2 + $0x1a0] sm:$0xff]
    %v152 = vld [vmem:[#allocation2 + $0x1a8] sm:$0xff]
    %v153 = vld [vmem:[#allocation2 + $0x1b0] sm:$0xff]
    %v154 = vld [vmem:[#allocation2 + $0x1b8] sm:$0xff]
    %v155 = vld [vmem:[#allocation2 + $0x1c0] sm:$0xff]
    %v156 = vld [vmem:[#allocation2 + $0x1c8] sm:$0xff]
    %v157 = vld [vmem:[#allocation2 + $0x1d0] sm:$0xff]
    %v158 = vld [vmem:[#allocation2 + $0x1d8] sm:$0xff]
    %v159 = vld [vmem:[#allocation2 + $0x1e0] sm:$0xff]
    %v160 = vld [vmem:[#allocation2 + $0x1e8] sm:$0xff]
    %v161 = vld [vmem:[#allocation2 + $0x1f0] sm:$0xff]
    %v162 = vld [vmem:[#allocation2 + $0x1f8] sm:$0xff]
    %v163 = vld [vmem:[#allocation2 + $0x200] sm:$0xff]
    %v164 = vld [vmem:[#allocation2 + $0x208] sm:$0xff]
    %v165 = vld [vmem:[#allocation2 + $0x210] sm:$0xff]
    %v166 = vld [vmem:[#allocation2 + $0x218] sm:$0xff]
    %v167 = vld [vmem:[#allocation2 + $0x220] sm:$0xff]
    %v168 = vld [vmem:[#allocation2 + $0x228] sm:$0xff]
    %v169 = vld [vmem:[#allocation2 + $0x230] sm:$0xff]
    %v170 = vld [vmem:[#allocation2 + $0x238] sm:$0xff]
    %v171 = vld [vmem:[#allocation2 + $0x240] sm:$0xff]
    %v172 = vld [vmem:[#allocation2 + $0x248] sm:$0xff]
    %v173 = vld [vmem:[#allocation2 + $0x250] sm:$0xff]
    %v174 = vld [vmem:[#allocation2 + $0x258] sm:$0xff]
    %v175 = vld [vmem:[#allocation2 + $0x260] sm:$0xff]
    %v176 = vld [vmem:[#allocation2 + $0x268] sm:$0xff]
    %v177 = vld [vmem:[#allocation2 + $0x270] sm:$0xff]
    %v178 = vld [vmem:[#allocation2 + $0x278] sm:$0xff]
    %v179 = vld [vmem:[#allocation2 + $0x280] sm:$0xff]
    %v180 = vld [vmem:[#allocation2 + $0x288] sm:$0xff]
    %v181 = vld [vmem:[#allocation2 + $0x290] sm:$0xff]
    %v182 = vld [vmem:[#allocation2 + $0x298] sm:$0xff]
    %v183 = vld [vmem:[#allocation2 + $0x2a0] sm:$0xff]
    %v184 = vld [vmem:[#allocation2 + $0x2a8] sm:$0xff]
    %v185 = vld [vmem:[#allocation2 + $0x2b0] sm:$0xff]
    %v186 = vld [vmem:[#allocation2 + $0x2b8] sm:$0xff]
    %v187 = vld [vmem:[#allocation2 + $0x2c0] sm:$0xff]
    %v188 = vld [vmem:[#allocation2 + $0x2c8] sm:$0xff]
    %v189 = vld [vmem:[#allocation2 + $0x2d0] sm:$0xff]
    %v190 = vld [vmem:[#allocation2 + $0x2d8] sm:$0xff]
    %v191 = vld [vmem:[#allocation2 + $0x2e0] sm:$0xff]
    %v192 = vld [vmem:[#allocation2 + $0x2e8] sm:$0xff]
    %v193 = vld [vmem:[#allocation2 + $0x2f0] sm:$0xff]
    %v194 = vld [vmem:[#allocation2 + $0x2f8] sm:$0xff]
    %v195 = vld [vmem:[#allocation2 + $0x300] sm:$0xff]
    %v196 = vld [vmem:[#allocation2 + $0x308] sm:$0xff]
    %v197 = vld [vmem:[#allocation2 + $0x310] sm:$0xff]
    %v198 = vld [vmem:[#allocation2 + $0x318] sm:$0xff]
    %v199 = vld [vmem:[#allocation2 + $0x320] sm:$0xff]
    %v200 = vld [vmem:[#allocation2 + $0x328] sm:$0xff]
    %v201 = vld [vmem:[#allocation2 + $0x330] sm:$0xff]
    %v202 = vld [vmem:[#allocation2 + $0x338] sm:$0xff]
    %v203 = vld [vmem:[#allocation2 + $0x340] sm:$0xff]
    %v204 = vld [vmem:[#allocation2 + $0x348] sm:$0xff]
    %v205 = vld [vmem:[#allocation2 + $0x350] sm:$0xff]
    %v206 = vld [vmem:[#allocation2 + $0x358] sm:$0xff]
    %v207 = vld [vmem:[#allocation2 + $0x360] sm:$0xff]
    %v208 = vld [vmem:[#allocation2 + $0x368] sm:$0xff]
    %v209 = vld [vmem:[#allocation2 + $0x370] sm:$0xff]
    %v210 = vld [vmem:[#allocation2 + $0x378] sm:$0xff]
    %v211 = vld [vmem:[#allocation2 + $0x380] sm:$0xff]
    %v212 = vld [vmem:[#allocation2 + $0x388] sm:$0xff]
    %v213 = vld [vmem:[#allocation2 + $0x390] sm:$0xff]
    %v214 = vld [vmem:[#allocation2 + $0x398] sm:$0xff]
    %v215 = vld [vmem:[#allocation2 + $0x3a0] sm:$0xff]
    %v216 = vld [vmem:[#allocation2 + $0x3a8] sm:$0xff]
    %v217 = vld [vmem:[#allocation2 + $0x3b0] sm:$0xff]
    %v218 = vld [vmem:[#allocation2 + $0x3b8] sm:$0xff]
    %v219 = vld [vmem:[#allocation2 + $0x3c0] sm:$0xff]
    %v220 = vld [vmem:[#allocation2 + $0x3c8] sm:$0xff]
    %v221 = vld [vmem:[#allocation2 + $0x3d0] sm:$0xff]
    %v222 = vld [vmem:[#allocation2 + $0x3d8] sm:$0xff]
    %v223 = vld [vmem:[#allocation2 + $0x3e0] sm:$0xff]
    %v224 = vld [vmem:[#allocation2 + $0x3e8] sm:$0xff]
    %v225 = vld [vmem:[#allocation2 + $0x3f0] sm:$0xff]
    %v226 = vld [vmem:[#allocation2 + $0x3f8] sm:$0xff]
    %v227 = vld [vmem:[#allocation2 + $0x400] sm:$0xff]
    %v228 = vld [vmem:[#allocation2 + $0x408] sm:$0xff]
    %v229 = vld [vmem:[#allocation2 + $0x410] sm:$0xff]
    %v230 = vld [vmem:[#allocation2 + $0x418] sm:$0xff]
    %v231 = vld [vmem:[#allocation2 + $0x420] sm:$0xff]
    %v232 = vld [vmem:[#allocation2 + $0x428] sm:$0xff]
    %v233 = vld [vmem:[#allocation2 + $0x430] sm:$0xff]
    %v234 = vld [vmem:[#allocation2 + $0x438] sm:$0xff]
    %v235 = vld [vmem:[#allocation2 + $0x440] sm:$0xff]
    %v236 = vld [vmem:[#allocation2 + $0x448] sm:$0xff]
    %v237 = vld [vmem:[#allocation2 + $0x450] sm:$0xff]
    %v238 = vld [vmem:[#allocation2 + $0x458] sm:$0xff]
    %v239 = vld [vmem:[#allocation2 + $0x460] sm:$0xff]
    %v240 = vld [vmem:[#allocation2 + $0x468] sm:$0xff]
    %v241 = vld [vmem:[#allocation2 + $0x470] sm:$0xff]
    %v242 = vld [vmem:[#allocation2 + $0x478] sm:$0xff]
    %v243 = vld [vmem:[#allocation2 + $0x480] sm:$0xff]
    %v244 = vld [vmem:[#allocation2 + $0x488] sm:$0xff]
    %v245 = vld [vmem:[#allocation2 + $0x490] sm:$0xff]
    %v246 = vld [vmem:[#allocation2 + $0x498] sm:$0xff]
    %v247 = vld [vmem:[#allocation2 + $0x4a0] sm:$0xff]
    %v248 = vld [vmem:[#allocation2 + $0x4a8] sm:$0xff]
    %v249 = vld [vmem:[#allocation2 + $0x4b0] sm:$0xff]
    %v250 = vld [vmem:[#allocation2 + $0x4b8] sm:$0xff]
    %v251 = vld [vmem:[#allocation2 + $0x4c0] sm:$0xff]
    %v252 = vld [vmem:[#allocation2 + $0x4c8] sm:$0xff]
    %v253 = vld [vmem:[#allocation2 + $0x4d0] sm:$0xff]
    %v254 = vld [vmem:[#allocation2 + $0x4d8] sm:$0xff]
    %v255 = vld [vmem:[#allocation2 + $0x4e0] sm:$0x11]
    %v256 = vld [vmem:[#allocation2 + $0x4e8] sm:$0x11]
    %v257 = vld [vmem:[%s2] sm:$0xf]
    %v259 = vperm.slane %v257, 0
    %v260 = vperm.slane %v257, 1
    %v261 = vperm.slane %v257, 2
    %v262 = vperm.slane %v257, 3
    %v425 = vunpack.c.l.b16 %v99
    %v426 = vunpack.c.h.b16 %v99
    %v427 = vunpack.c.l.b16 %v100
    %v428 = vunpack.c.h.b16 %v100
    %v429 = vunpack.c.l.b16 %v101
    %v430 = vunpack.c.h.b16 %v101
    %v431 = vunpack.c.l.b16 %v102
    %v432 = vunpack.c.h.b16 %v102
    %v433 = vunpack.c.l.b16 %v103
    %v434 = vunpack.c.h.b16 %v103
    %v435 = vunpack.c.l.b16 %v104
    %v436 = vunpack.c.h.b16 %v104
    %v437 = vunpack.c.l.b16 %v105
    %v438 = vunpack.c.h.b16 %v105
    %v439 = vunpack.c.l.b16 %v106
    %v440 = vunpack.c.h.b16 %v106
    %v441 = vunpack.c.l.b16 %v107
    %v442 = vunpack.c.h.b16 %v107
    %v443 = vunpack.c.l.b16 %v108
    %v444 = vunpack.c.h.b16 %v108
    %v445 = vunpack.c.l.b16 %v109
    %v446 = vunpack.c.h.b16 %v109
    %v447 = vunpack.c.l.b16 %v110
    %v448 = vunpack.c.h.b16 %v110
    %v449 = vunpack.c.l.b16 %v111
    %v450 = vunpack.c.h.b16 %v111
    %v451 = vunpack.c.l.b16 %v112
    %v452 = vunpack.c.h.b16 %v112
    %v453 = vunpack.c.l.b16 %v113
    %v454 = vunpack.c.h.b16 %v113
    %v455 = vunpack.c.l.b16 %v114
    %v456 = vunpack.c.h.b16 %v114
    %v457 = vunpack.c.l.b16 %v115
    %v458 = vunpack.c.h.b16 %v115
    %v459 = vunpack.c.l.b16 %v116
    %v460 = vunpack.c.h.b16 %v116
    %v461 = vunpack.c.l.b16 %v117
    %v462 = vunpack.c.h.b16 %v117
    %v463 = vunpack.c.l.b16 %v118
    %v464 = vunpack.c.h.b16 %v118
    %v465 = vunpack.c.l.b16 %v119
    %v466 = vunpack.c.h.b16 %v119
    %v467 = vunpack.c.l.b16 %v120
    %v468 = vunpack.c.h.b16 %v120
    %v469 = vunpack.c.l.b16 %v121
    %v470 = vunpack.c.h.b16 %v121
    %v471 = vunpack.c.l.b16 %v122
    %v472 = vunpack.c.h.b16 %v122
    %v473 = vunpack.c.l.b16 %v123
    %v474 = vunpack.c.h.b16 %v123
    %v475 = vunpack.c.l.b16 %v124
    %v476 = vunpack.c.h.b16 %v124
    %v477 = vunpack.c.l.b16 %v125
    %v478 = vunpack.c.h.b16 %v125
    %v479 = vunpack.c.l.b16 %v126
    %v480 = vunpack.c.h.b16 %v126
    %v481 = vunpack.c.l.b16 %v127
    %v482 = vunpack.c.h.b16 %v127
    %v483 = vunpack.c.l.b16 %v128
    %v484 = vunpack.c.h.b16 %v128
    %v485 = vunpack.c.l.b16 %v129
    %v486 = vunpack.c.h.b16 %v129
    %v487 = vunpack.c.l.b16 %v130
    %v488 = vunpack.c.h.b16 %v130
    %v489 = vunpack.c.l.b16 %v131
    %v490 = vunpack.c.h.b16 %v131
    %v491 = vunpack.c.l.b16 %v132
    %v492 = vunpack.c.h.b16 %v132
    %v493 = vunpack.c.l.b16 %v133
    %v494 = vunpack.c.h.b16 %v133
    %v495 = vunpack.c.l.b16 %v134
    %v496 = vunpack.c.h.b16 %v134
    %v497 = vunpack.c.l.b16 %v135
    %v498 = vunpack.c.h.b16 %v135
    %v499 = vunpack.c.l.b16 %v136
    %v500 = vunpack.c.h.b16 %v136
    %v501 = vunpack.c.l.b16 %v137
    %v502 = vunpack.c.h.b16 %v137
    %v503 = vunpack.c.l.b16 %v138
    %v504 = vunpack.c.h.b16 %v138
    %v505 = vunpack.c.l.b16 %v139
    %v506 = vunpack.c.h.b16 %v139
    %v507 = vunpack.c.l.b16 %v140
    %v508 = vunpack.c.h.b16 %v140
    %v509 = vunpack.c.l.b16 %v141
    %v510 = vunpack.c.h.b16 %v141
    %v511 = vunpack.c.l.b16 %v142
    %v512 = vunpack.c.h.b16 %v142
    %v513 = vunpack.c.l.b16 %v143
    %v514 = vunpack.c.h.b16 %v143
    %v515 = vunpack.c.l.b16 %v144
    %v516 = vunpack.c.h.b16 %v144
    %v517 = vunpack.c.l.b16 %v145
    %v518 = vunpack.c.h.b16 %v145
    %v519 = vunpack.c.l.b16 %v146
    %v520 = vunpack.c.h.b16 %v146
    %v521 = vunpack.c.l.b16 %v147
    %v522 = vunpack.c.h.b16 %v147
    %v523 = vunpack.c.l.b16 %v148
    %v524 = vunpack.c.h.b16 %v148
    %v525 = vunpack.c.l.b16 %v149
    %v526 = vunpack.c.h.b16 %v149
    %v527 = vunpack.c.l.b16 %v150
    %v528 = vunpack.c.h.b16 %v150
    %v529 = vunpack.c.l.b16 %v151
    %v530 = vunpack.c.h.b16 %v151
    %v531 = vunpack.c.l.b16 %v152
    %v532 = vunpack.c.h.b16 %v152
    %v533 = vunpack.c.l.b16 %v153
    %v534 = vunpack.c.h.b16 %v153
    %v535 = vunpack.c.l.b16 %v154
    %v536 = vunpack.c.h.b16 %v154
    %v537 = vunpack.c.l.b16 %v155
    %v538 = vunpack.c.h.b16 %v155
    %v539 = vunpack.c.l.b16 %v156
    %v540 = vunpack.c.h.b16 %v156
    %v541 = vunpack.c.l.b16 %v157
    %v542 = vunpack.c.h.b16 %v157
    %v543 = vunpack.c.l.b16 %v158
    %v544 = vunpack.c.h.b16 %v158
    %v545 = vunpack.c.l.b16 %v159
    %v546 = vunpack.c.h.b16 %v159
    %v547 = vunpack.c.l.b16 %v160
    %v548 = vunpack.c.h.b16 %v160
    %v549 = vunpack.c.l.b16 %v161
    %v550 = vunpack.c.h.b16 %v161
    %v551 = vunpack.c.l.b16 %v162
    %v552 = vunpack.c.h.b16 %v162
    %v553 = vunpack.c.l.b16 %v163
    %v554 = vunpack.c.h.b16 %v163
    %v555 = vunpack.c.l.b16 %v164
    %v556 = vunpack.c.h.b16 %v164
    %v557 = vunpack.c.l.b16 %v165
    %v558 = vunpack.c.h.b16 %v165
    %v559 = vunpack.c.l.b16 %v166
    %v560 = vunpack.c.h.b16 %v166
    %v561 = vunpack.c.l.b16 %v167
    %v562 = vunpack.c.h.b16 %v167
    %v563 = vunpack.c.l.b16 %v168
    %v564 = vunpack.c.h.b16 %v168
    %v565 = vunpack.c.l.b16 %v169
    %v566 = vunpack.c.h.b16 %v169
    %v567 = vunpack.c.l.b16 %v170
    %v568 = vunpack.c.h.b16 %v170
    %v569 = vunpack.c.l.b16 %v171
    %v570 = vunpack.c.h.b16 %v171
    %v571 = vunpack.c.l.b16 %v172
    %v572 = vunpack.c.h.b16 %v172
    %v573 = vunpack.c.l.b16 %v173
    %v574 = vunpack.c.h.b16 %v173
    %v575 = vunpack.c.l.b16 %v174
    %v576 = vunpack.c.h.b16 %v174
    %v577 = vunpack.c.l.b16 %v175
    %v578 = vunpack.c.h.b16 %v175
    %v579 = vunpack.c.l.b16 %v176
    %v580 = vunpack.c.h.b16 %v176
    %v581 = vunpack.c.l.b16 %v177
    %v582 = vunpack.c.h.b16 %v177
    %v583 = vunpack.c.l.b16 %v178
    %v584 = vunpack.c.h.b16 %v178
    %v585 = vunpack.c.l.b16 %v179
    %v586 = vunpack.c.h.b16 %v179
    %v587 = vunpack.c.l.b16 %v180
    %v588 = vunpack.c.h.b16 %v180
    %v589 = vunpack.c.l.b16 %v181
    %v590 = vunpack.c.h.b16 %v181
    %v591 = vunpack.c.l.b16 %v182
    %v592 = vunpack.c.h.b16 %v182
    %v593 = vunpack.c.l.b16 %v183
    %v594 = vunpack.c.h.b16 %v183
    %v595 = vunpack.c.l.b16 %v184
    %v596 = vunpack.c.h.b16 %v184
    %v597 = vunpack.c.l.b16 %v185
    %v598 = vunpack.c.h.b16 %v185
    %v599 = vunpack.c.l.b16 %v186
    %v600 = vunpack.c.h.b16 %v186
    %v601 = vunpack.c.l.b16 %v187
    %v602 = vunpack.c.h.b16 %v187
    %v603 = vunpack.c.l.b16 %v188
    %v604 = vunpack.c.h.b16 %v188
    %v605 = vunpack.c.l.b16 %v189
    %v606 = vunpack.c.h.b16 %v189
    %v607 = vunpack.c.l.b16 %v190
    %v608 = vunpack.c.h.b16 %v190
    %v609 = vunpack.c.l.b16 %v191
    %v610 = vunpack.c.h.b16 %v191
    %v611 = vunpack.c.l.b16 %v192
    %v612 = vunpack.c.h.b16 %v192
    %v613 = vunpack.c.l.b16 %v193
    %v614 = vunpack.c.h.b16 %v193
    %v615 = vunpack.c.l.b16 %v194
    %v616 = vunpack.c.h.b16 %v194
    %v617 = vunpack.c.l.b16 %v195
    %v618 = vunpack.c.h.b16 %v195
    %v619 = vunpack.c.l.b16 %v196
    %v620 = vunpack.c.h.b16 %v196
    %v621 = vunpack.c.l.b16 %v197
    %v622 = vunpack.c.h.b16 %v197
    %v623 = vunpack.c.l.b16 %v198
    %v624 = vunpack.c.h.b16 %v198
    %v625 = vunpack.c.l.b16 %v199
    %v626 = vunpack.c.h.b16 %v199
    %v627 = vunpack.c.l.b16 %v200
    %v628 = vunpack.c.h.b16 %v200
    %v629 = vunpack.c.l.b16 %v201
    %v630 = vunpack.c.h.b16 %v201
    %v631 = vunpack.c.l.b16 %v202
    %v632 = vunpack.c.h.b16 %v202
    %v633 = vunpack.c.l.b16 %v203
    %v634 = vunpack.c.h.b16 %v203
    %v635 = vunpack.c.l.b16 %v204
    %v636 = vunpack.c.h.b16 %v204
    %v637 = vunpack.c.l.b16 %v205
    %v638 = vunpack.c.h.b16 %v205
    %v639 = vunpack.c.l.b16 %v206
    %v640 = vunpack.c.h.b16 %v206
    %v641 = vunpack.c.l.b16 %v207
    %v642 = vunpack.c.h.b16 %v207
    %v643 = vunpack.c.l.b16 %v208
    %v644 = vunpack.c.h.b16 %v208
    %v645 = vunpack.c.l.b16 %v209
    %v646 = vunpack.c.h.b16 %v209
    %v647 = vunpack.c.l.b16 %v210
    %v648 = vunpack.c.h.b16 %v210
    %v649 = vunpack.c.l.b16 %v211
    %v650 = vunpack.c.h.b16 %v211
    %v651 = vunpack.c.l.b16 %v212
    %v652 = vunpack.c.h.b16 %v212
    %v653 = vunpack.c.l.b16 %v213
    %v654 = vunpack.c.h.b16 %v213
    %v655 = vunpack.c.l.b16 %v214
    %v656 = vunpack.c.h.b16 %v214
    %v657 = vunpack.c.l.b16 %v215
    %v658 = vunpack.c.h.b16 %v215
    %v659 = vunpack.c.l.b16 %v216
    %v660 = vunpack.c.h.b16 %v216
    %v661 = vunpack.c.l.b16 %v217
    %v662 = vunpack.c.h.b16 %v217
    %v663 = vunpack.c.l.b16 %v218
    %v664 = vunpack.c.h.b16 %v218
    %v665 = vunpack.c.l.b16 %v219
    %v666 = vunpack.c.h.b16 %v219
    %v667 = vunpack.c.l.b16 %v220
    %v668 = vunpack.c.h.b16 %v220
    %v669 = vunpack.c.l.b16 %v221
    %v670 = vunpack.c.h.b16 %v221
    %v671 = vunpack.c.l.b16 %v222
    %v672 = vunpack.c.h.b16 %v222
    %v673 = vunpack.c.l.b16 %v223
    %v674 = vunpack.c.h.b16 %v223
    %v675 = vunpack.c.l.b16 %v224
    %v676 = vunpack.c.h.b16 %v224
    %v677 = vunpack.c.l.b16 %v225
    %v678 = vunpack.c.h.b16 %v225
    %v679 = vunpack.c.l.b16 %v226
    %v680 = vunpack.c.h.b16 %v226
    %v681 = vunpack.c.l.b16 %v227
    %v682 = vunpack.c.h.b16 %v227
    %v683 = vunpack.c.l.b16 %v228
    %v684 = vunpack.c.h.b16 %v228
    %v685 = vunpack.c.l.b16 %v229
    %v686 = vunpack.c.h.b16 %v229
    %v687 = vunpack.c.l.b16 %v230
    %v688 = vunpack.c.h.b16 %v230
    %v689 = vunpack.c.l.b16 %v231
    %v690 = vunpack.c.h.b16 %v231
    %v691 = vunpack.c.l.b16 %v232
    %v692 = vunpack.c.h.b16 %v232
    %v693 = vunpack.c.l.b16 %v233
    %v694 = vunpack.c.h.b16 %v233
    %v695 = vunpack.c.l.b16 %v234
    %v696 = vunpack.c.h.b16 %v234
    %v697 = vunpack.c.l.b16 %v235
    %v698 = vunpack.c.h.b16 %v235
    %v699 = vunpack.c.l.b16 %v236
    %v700 = vunpack.c.h.b16 %v236
    %v701 = vunpack.c.l.b16 %v237
    %v702 = vunpack.c.h.b16 %v237
    %v703 = vunpack.c.l.b16 %v238
    %v704 = vunpack.c.h.b16 %v238
    %v705 = vunpack.c.l.b16 %v239
    %v706 = vunpack.c.h.b16 %v239
    %v707 = vunpack.c.l.b16 %v240
    %v708 = vunpack.c.h.b16 %v240
    %v709 = vunpack.c.l.b16 %v241
    %v710 = vunpack.c.h.b16 %v241
    %v711 = vunpack.c.l.b16 %v242
    %v712 = vunpack.c.h.b16 %v242
    %v713 = vunpack.c.l.b16 %v243
    %v714 = vunpack.c.h.b16 %v243
    %v715 = vunpack.c.l.b16 %v244
    %v716 = vunpack.c.h.b16 %v244
    %v717 = vunpack.c.l.b16 %v245
    %v718 = vunpack.c.h.b16 %v245
    %v719 = vunpack.c.l.b16 %v246
    %v720 = vunpack.c.h.b16 %v246
    %v721 = vunpack.c.l.b16 %v247
    %v722 = vunpack.c.h.b16 %v247
    %v723 = vunpack.c.l.b16 %v248
    %v724 = vunpack.c.h.b16 %v248
    %v725 = vunpack.c.l.b16 %v249
    %v726 = vunpack.c.h.b16 %v249
    %v727 = vunpack.c.l.b16 %v250
    %v728 = vunpack.c.h.b16 %v250
    %v729 = vunpack.c.l.b16 %v251
    %v730 = vunpack.c.h.b16 %v251
    %v731 = vunpack.c.l.b16 %v252
    %v732 = vunpack.c.h.b16 %v252
    %v733 = vunpack.c.l.b16 %v253
    %v734 = vunpack.c.h.b16 %v253
    %v735 = vunpack.c.l.b16 %v254
    %v736 = vunpack.c.h.b16 %v254
    %v737 = vunpack.c.l.b16 %v255
    %v738 = vunpack.c.h.b16 %v255
    %v739 = vunpack.c.l.b16 %v256
    %v740 = vunpack.c.h.b16 %v256
    %v741 = vpack.c.b16 %v429, %v425
    %v742 = vpack.c.b16 %v430, %v426
    %v743 = vpack.c.b16 %v431, %v427
    %v744 = vpack.c.b16 %v432, %v428
    %v745 = vpack.c.b16 %v437, %v433
    %v746 = vpack.c.b16 %v438, %v434
    %v747 = vpack.c.b16 %v439, %v435
    %v748 = vpack.c.b16 %v440, %v436
    %v749 = vpack.c.b16 %v445, %v441
    %v750 = vpack.c.b16 %v446, %v442
    %v751 = vpack.c.b16 %v447, %v443
    %v752 = vpack.c.b16 %v448, %v444
    %v753 = vpack.c.b16 %v453, %v449
    %v754 = vpack.c.b16 %v454, %v450
    %v755 = vpack.c.b16 %v455, %v451
    %v756 = vpack.c.b16 %v456, %v452
    %v757 = vpack.c.b16 %v461, %v457
    %v758 = vpack.c.b16 %v462, %v458
    %v759 = vpack.c.b16 %v463, %v459
    %v760 = vpack.c.b16 %v464, %v460
    %v761 = vpack.c.b16 %v469, %v465
    %v762 = vpack.c.b16 %v470, %v466
    %v763 = vpack.c.b16 %v471, %v467
    %v764 = vpack.c.b16 %v472, %v468
    %v765 = vpack.c.b16 %v477, %v473
    %v766 = vpack.c.b16 %v478, %v474
    %v767 = vpack.c.b16 %v479, %v475
    %v768 = vpack.c.b16 %v480, %v476
    %v769 = vpack.c.b16 %v485, %v481
    %v770 = vpack.c.b16 %v486, %v482
    %v771 = vpack.c.b16 %v487, %v483
    %v772 = vpack.c.b16 %v488, %v484
    %v773 = vpack.c.b16 %v493, %v489
    %v774 = vpack.c.b16 %v494, %v490
    %v775 = vpack.c.b16 %v495, %v491
    %v776 = vpack.c.b16 %v496, %v492
    %v777 = vpack.c.b16 %v501, %v497
    %v778 = vpack.c.b16 %v502, %v498
    %v779 = vpack.c.b16 %v503, %v499
    %v780 = vpack.c.b16 %v504, %v500
    %v781 = vpack.c.b16 %v509, %v505
    %v782 = vpack.c.b16 %v510, %v506
    %v783 = vpack.c.b16 %v511, %v507
    %v784 = vpack.c.b16 %v512, %v508
    %v785 = vpack.c.b16 %v517, %v513
    %v786 = vpack.c.b16 %v518, %v514
    %v787 = vpack.c.b16 %v519, %v515
    %v788 = vpack.c.b16 %v520, %v516
    %v789 = vpack.c.b16 %v525, %v521
    %v790 = vpack.c.b16 %v526, %v522
    %v791 = vpack.c.b16 %v527, %v523
    %v792 = vpack.c.b16 %v528, %v524
    %v793 = vpack.c.b16 %v533, %v529
    %v794 = vpack.c.b16 %v534, %v530
    %v795 = vpack.c.b16 %v535, %v531
    %v796 = vpack.c.b16 %v536, %v532
    %v797 = vpack.c.b16 %v541, %v537
    %v798 = vpack.c.b16 %v542, %v538
    %v799 = vpack.c.b16 %v543, %v539
    %v800 = vpack.c.b16 %v544, %v540
    %v801 = vpack.c.b16 %v549, %v545
    %v802 = vpack.c.b16 %v550, %v546
    %v803 = vpack.c.b16 %v551, %v547
    %v804 = vpack.c.b16 %v552, %v548
    %v805 = vpack.c.b16 %v557, %v553
    %v806 = vpack.c.b16 %v558, %v554
    %v807 = vpack.c.b16 %v559, %v555
    %v808 = vpack.c.b16 %v560, %v556
    %v809 = vpack.c.b16 %v565, %v561
    %v810 = vpack.c.b16 %v566, %v562
    %v811 = vpack.c.b16 %v567, %v563
    %v812 = vpack.c.b16 %v568, %v564
    %v813 = vpack.c.b16 %v573, %v569
    %v814 = vpack.c.b16 %v574, %v570
    %v815 = vpack.c.b16 %v575, %v571
    %v816 = vpack.c.b16 %v576, %v572
    %v817 = vpack.c.b16 %v581, %v577
    %v818 = vpack.c.b16 %v582, %v578
    %v819 = vpack.c.b16 %v583, %v579
    %v820 = vpack.c.b16 %v584, %v580
    %v821 = vpack.c.b16 %v589, %v585
    %v822 = vpack.c.b16 %v590, %v586
    %v823 = vpack.c.b16 %v591, %v587
    %v824 = vpack.c.b16 %v592, %v588
    %v825 = vpack.c.b16 %v597, %v593
    %v826 = vpack.c.b16 %v598, %v594
    %v827 = vpack.c.b16 %v599, %v595
    %v828 = vpack.c.b16 %v600, %v596
    %v829 = vpack.c.b16 %v605, %v601
    %v830 = vpack.c.b16 %v606, %v602
    %v831 = vpack.c.b16 %v607, %v603
    %v832 = vpack.c.b16 %v608, %v604
    %v833 = vpack.c.b16 %v613, %v609
    %v834 = vpack.c.b16 %v614, %v610
    %v835 = vpack.c.b16 %v615, %v611
    %v836 = vpack.c.b16 %v616, %v612
    %v837 = vpack.c.b16 %v621, %v617
    %v838 = vpack.c.b16 %v622, %v618
    %v839 = vpack.c.b16 %v623, %v619
    %v840 = vpack.c.b16 %v624, %v620
    %v841 = vpack.c.b16 %v629, %v625
    %v842 = vpack.c.b16 %v630, %v626
    %v843 = vpack.c.b16 %v631, %v627
    %v844 = vpack.c.b16 %v632, %v628
    %v845 = vpack.c.b16 %v637, %v633
    %v846 = vpack.c.b16 %v638, %v634
    %v847 = vpack.c.b16 %v639, %v635
    %v848 = vpack.c.b16 %v640, %v636
    %v849 = vpack.c.b16 %v645, %v641
    %v850 = vpack.c.b16 %v646, %v642
    %v851 = vpack.c.b16 %v647, %v643
    %v852 = vpack.c.b16 %v648, %v644
    %v853 = vpack.c.b16 %v653, %v649
    %v854 = vpack.c.b16 %v654, %v650
    %v855 = vpack.c.b16 %v655, %v651
    %v856 = vpack.c.b16 %v656, %v652
    %v857 = vpack.c.b16 %v661, %v657
    %v858 = vpack.c.b16 %v662, %v658
    %v859 = vpack.c.b16 %v663, %v659
    %v860 = vpack.c.b16 %v664, %v660
    %v861 = vpack.c.b16 %v669, %v665
    %v862 = vpack.c.b16 %v670, %v666
    %v863 = vpack.c.b16 %v671, %v667
    %v864 = vpack.c.b16 %v672, %v668
    %v865 = vpack.c.b16 %v677, %v673
    %v866 = vpack.c.b16 %v678, %v674
    %v867 = vpack.c.b16 %v679, %v675
    %v868 = vpack.c.b16 %v680, %v676
    %v869 = vpack.c.b16 %v685, %v681
    %v870 = vpack.c.b16 %v686, %v682
    %v871 = vpack.c.b16 %v687, %v683
    %v872 = vpack.c.b16 %v688, %v684
    %v873 = vpack.c.b16 %v693, %v689
    %v874 = vpack.c.b16 %v694, %v690
    %v875 = vpack.c.b16 %v695, %v691
    %v876 = vpack.c.b16 %v696, %v692
    %v877 = vpack.c.b16 %v701, %v697
    %v878 = vpack.c.b16 %v702, %v698
    %v879 = vpack.c.b16 %v703, %v699
    %v880 = vpack.c.b16 %v704, %v700
    %v881 = vpack.c.b16 %v709, %v705
    %v882 = vpack.c.b16 %v710, %v706
    %v883 = vpack.c.b16 %v711, %v707
    %v884 = vpack.c.b16 %v712, %v708
    %v885 = vpack.c.b16 %v717, %v713
    %v886 = vpack.c.b16 %v718, %v714
    %v887 = vpack.c.b16 %v719, %v715
    %v888 = vpack.c.b16 %v720, %v716
    %v889 = vpack.c.b16 %v725, %v721
    %v890 = vpack.c.b16 %v726, %v722
    %v891 = vpack.c.b16 %v727, %v723
    %v892 = vpack.c.b16 %v728, %v724
    %v893 = vpack.c.b16 %v733, %v729
    %v894 = vpack.c.b16 %v734, %v730
    %v895 = vpack.c.b16 %v735, %v731
    %v896 = vpack.c.b16 %v736, %v732
    %v897 = vpack.c.b16 %v737, %v737
    %v898 = vpack.c.b16 %v738, %v738
    %v899 = vpack.c.b16 %v739, %v739
    %v900 = vpack.c.b16 %v740, %v740
    %vm1057 = vcmask 924672
    %v1059 = vsel %vm1057, %v98, 0
    %vm1061 = vcmask 1040384
    %v1062 = vsel 0, 4294967295, 65535
    %v1063 = vsel %vm1061, %v1062, 0
    %v1065 = vand.u32 %v897, %v1063
    %v1068 = vand.u32 %v898, %v1063
    %v1071 = vand.u32 %v899, %v1063
    %v1074 = vand.u32 %v900, %v1063
    %1076 = vmatpush.bf16.msra.mxu0 %v769
    %1077 = vmatpush.bf16.msra.mxu0 %v765
    %1078 = vmatpush.bf16.msra.mxu0 %v761
    %1079 = vmatpush.bf16.msra.mxu0 %v757
    %1080 = vmatpush.bf16.msra.mxu0 %v753
    %1081 = vmatpush.bf16.msra.mxu0 %v749
    %1082 = vmatpush.bf16.msra.mxu0 %v745
    %1083 = vmatpush.bf16.msra.mxu0 %v741
    %1084 = vmatmul.bf16.gmra.mxu0 %v94
    %v1085 = vpop.f32.mrf.mxu0
    %v1086 = vadd.f32 %v259, %v1085
    %v1087 = vpop.f32.mrf.mxu0
    %1088 = vdwg.mxu0
    %1089 = vmatpush.bf16.msra.mxu0 %v801
    %1090 = vmatpush.bf16.msra.mxu0 %v797
    %1091 = vmatpush.bf16.msra.mxu0 %v793
    %1092 = vmatpush.bf16.msra.mxu0 %v789
    %1093 = vmatpush.bf16.msra.mxu0 %v785
    %1094 = vmatpush.bf16.msra.mxu0 %v781
    %1095 = vmatpush.bf16.msra.mxu0 %v777
    %1096 = vmatpush.bf16.msra.mxu0 %v773
    %1097 = vmatmul.bf16.gmra.mxu0 %v95
    %v1098 = vpop.f32.mrf.mxu0
    %v1099 = vadd.f32 %v1086, %v1098
    %v1100 = vpop.f32.mrf.mxu0
    %1101 = vdwg.mxu0
    %1102 = vmatpush.bf16.msra.mxu0 %v833
    %1103 = vmatpush.bf16.msra.mxu0 %v829
    %1104 = vmatpush.bf16.msra.mxu0 %v825
    %1105 = vmatpush.bf16.msra.mxu0 %v821
    %1106 = vmatpush.bf16.msra.mxu0 %v817
    %1107 = vmatpush.bf16.msra.mxu0 %v813
    %1108 = vmatpush.bf16.msra.mxu0 %v809
    %1109 = vmatpush.bf16.msra.mxu0 %v805
    %1110 = vmatmul.bf16.gmra.mxu0 %v96
    %v1111 = vpop.f32.mrf.mxu0
    %v1112 = vadd.f32 %v1099, %v1111
    %v1113 = vpop.f32.mrf.mxu0
    %1114 = vdwg.mxu0
    %1115 = vmatpush.bf16.msra.mxu0 %v865
    %1116 = vmatpush.bf16.msra.mxu0 %v861
    %1117 = vmatpush.bf16.msra.mxu0 %v857
    %1118 = vmatpush.bf16.msra.mxu0 %v853
    %1119 = vmatpush.bf16.msra.mxu0 %v849
    %1120 = vmatpush.bf16.msra.mxu0 %v845
    %1121 = vmatpush.bf16.msra.mxu0 %v841
    %1122 = vmatpush.bf16.msra.mxu0 %v837
    %1123 = vmatmul.bf16.gmra.mxu0 %v97
    %v1124 = vpop.f32.mrf.mxu0
    %v1125 = vadd.f32 %v1112, %v1124
    %v1126 = vpop.f32.mrf.mxu0
    %1127 = vdwg.mxu0
    %1128 = vmatpush.bf16.msra.mxu0 %v1065
    %1129 = vmatpush.bf16.msra.mxu0 %v893
    %1130 = vmatpush.bf16.msra.mxu0 %v889
    %1131 = vmatpush.bf16.msra.mxu0 %v885
    %1132 = vmatpush.bf16.msra.mxu0 %v881
    %1133 = vmatpush.bf16.msra.mxu0 %v877
    %1134 = vmatpush.bf16.msra.mxu0 %v873
    %1135 = vmatpush.bf16.msra.mxu0 %v869
    %1136 = vmatmul.bf16.gmra.mxu0 %v1059
    %v1137 = vpop.f32.mrf.mxu0
    %v1138 = vadd.f32 %v1125, %v1137
    %v1139 = vpop.f32.mrf.mxu0
    %1140 = vdwg.mxu0
    %1141 = vmatpush.bf16.msra.mxu0 %v770
    %1142 = vmatpush.bf16.msra.mxu0 %v766
    %1143 = vmatpush.bf16.msra.mxu0 %v762
    %1144 = vmatpush.bf16.msra.mxu0 %v758
    %1145 = vmatpush.bf16.msra.mxu0 %v754
    %1146 = vmatpush.bf16.msra.mxu0 %v750
    %1147 = vmatpush.bf16.msra.mxu0 %v746
    %1148 = vmatpush.bf16.msra.mxu0 %v742
    %1149 = vmatmul.bf16.gmra.mxu0 %v94
    %v1150 = vpop.f32.mrf.mxu0
    %v1151 = vadd.f32 %v260, %v1150
    %v1152 = vpop.f32.mrf.mxu0
    %1153 = vdwg.mxu0
    %1154 = vmatpush.bf16.msra.mxu0 %v802
    %1155 = vmatpush.bf16.msra.mxu0 %v798
    %1156 = vmatpush.bf16.msra.mxu0 %v794
    %1157 = vmatpush.bf16.msra.mxu0 %v790
    %1158 = vmatpush.bf16.msra.mxu0 %v786
    %1159 = vmatpush.bf16.msra.mxu0 %v782
    %1160 = vmatpush.bf16.msra.mxu0 %v778
    %1161 = vmatpush.bf16.msra.mxu0 %v774
    %1162 = vmatmul.bf16.gmra.mxu0 %v95
    %v1163 = vpop.f32.mrf.mxu0
    %v1164 = vadd.f32 %v1151, %v1163
    %v1165 = vpop.f32.mrf.mxu0
    %1166 = vdwg.mxu0
    %1167 = vmatpush.bf16.msra.mxu0 %v834
    %1168 = vmatpush.bf16.msra.mxu0 %v830
    %1169 = vmatpush.bf16.msra.mxu0 %v826
    %1170 = vmatpush.bf16.msra.mxu0 %v822
    %1171 = vmatpush.bf16.msra.mxu0 %v818
    %1172 = vmatpush.bf16.msra.mxu0 %v814
    %1173 = vmatpush.bf16.msra.mxu0 %v810
    %1174 = vmatpush.bf16.msra.mxu0 %v806
    %1175 = vmatmul.bf16.gmra.mxu0 %v96
    %v1176 = vpop.f32.mrf.mxu0
    %v1177 = vadd.f32 %v1164, %v1176
    %v1178 = vpop.f32.mrf.mxu0
    %1179 = vdwg.mxu0
    %1180 = vmatpush.bf16.msra.mxu0 %v866
    %1181 = vmatpush.bf16.msra.mxu0 %v862
    %1182 = vmatpush.bf16.msra.mxu0 %v858
    %1183 = vmatpush.bf16.msra.mxu0 %v854
    %1184 = vmatpush.bf16.msra.mxu0 %v850
    %1185 = vmatpush.bf16.msra.mxu0 %v846
    %1186 = vmatpush.bf16.msra.mxu0 %v842
    %1187 = vmatpush.bf16.msra.mxu0 %v838
    %1188 = vmatmul.bf16.gmra.mxu0 %v97
    %v1189 = vpop.f32.mrf.mxu0
    %v1190 = vadd.f32 %v1177, %v1189
    %v1191 = vpop.f32.mrf.mxu0
    %1192 = vdwg.mxu0
    %1193 = vmatpush.bf16.msra.mxu0 %v1068
    %1194 = vmatpush.bf16.msra.mxu0 %v894
    %1195 = vmatpush.bf16.msra.mxu0 %v890
    %1196 = vmatpush.bf16.msra.mxu0 %v886
    %1197 = vmatpush.bf16.msra.mxu0 %v882
    %1198 = vmatpush.bf16.msra.mxu0 %v878
    %1199 = vmatpush.bf16.msra.mxu0 %v874
    %1200 = vmatpush.bf16.msra.mxu0 %v870
    %1201 = vmatmul.bf16.gmra.mxu0 %v1059
    %v1202 = vpop.f32.mrf.mxu0
    %v1203 = vadd.f32 %v1190, %v1202
    %v1204 = vpop.f32.mrf.mxu0
    %1205 = vdwg.mxu0
    %1206 = vmatpush.bf16.msra.mxu0 %v771
    %1207 = vmatpush.bf16.msra.mxu0 %v767
    %1208 = vmatpush.bf16.msra.mxu0 %v763
    %1209 = vmatpush.bf16.msra.mxu0 %v759
    %1210 = vmatpush.bf16.msra.mxu0 %v755
    %1211 = vmatpush.bf16.msra.mxu0 %v751
    %1212 = vmatpush.bf16.msra.mxu0 %v747
    %1213 = vmatpush.bf16.msra.mxu0 %v743
    %1214 = vmatmul.bf16.gmra.mxu0 %v94
    %v1215 = vpop.f32.mrf.mxu0
    %v1216 = vadd.f32 %v261, %v1215
    %v1217 = vpop.f32.mrf.mxu0
    %1218 = vdwg.mxu0
    %1219 = vmatpush.bf16.msra.mxu0 %v803
    %1220 = vmatpush.bf16.msra.mxu0 %v799
    %1221 = vmatpush.bf16.msra.mxu0 %v795
    %1222 = vmatpush.bf16.msra.mxu0 %v791
    %1223 = vmatpush.bf16.msra.mxu0 %v787
    %1224 = vmatpush.bf16.msra.mxu0 %v783
    %1225 = vmatpush.bf16.msra.mxu0 %v779
    %1226 = vmatpush.bf16.msra.mxu0 %v775
    %1227 = vmatmul.bf16.gmra.mxu0 %v95
    %v1228 = vpop.f32.mrf.mxu0
    %v1229 = vadd.f32 %v1216, %v1228
    %v1230 = vpop.f32.mrf.mxu0
    %1231 = vdwg.mxu0
    %1232 = vmatpush.bf16.msra.mxu0 %v835
    %1233 = vmatpush.bf16.msra.mxu0 %v831
    %1234 = vmatpush.bf16.msra.mxu0 %v827
    %1235 = vmatpush.bf16.msra.mxu0 %v823
    %1236 = vmatpush.bf16.msra.mxu0 %v819
    %1237 = vmatpush.bf16.msra.mxu0 %v815
    %1238 = vmatpush.bf16.msra.mxu0 %v811
    %1239 = vmatpush.bf16.msra.mxu0 %v807
    %1240 = vmatmul.bf16.gmra.mxu0 %v96
    %v1241 = vpop.f32.mrf.mxu0
    %v1242 = vadd.f32 %v1229, %v1241
    %v1243 = vpop.f32.mrf.mxu0
    %1244 = vdwg.mxu0
    %1245 = vmatpush.bf16.msra.mxu0 %v867
    %1246 = vmatpush.bf16.msra.mxu0 %v863
    %1247 = vmatpush.bf16.msra.mxu0 %v859
    %1248 = vmatpush.bf16.msra.mxu0 %v855
    %1249 = vmatpush.bf16.msra.mxu0 %v851
    %1250 = vmatpush.bf16.msra.mxu0 %v847
    %1251 = vmatpush.bf16.msra.mxu0 %v843
    %1252 = vmatpush.bf16.msra.mxu0 %v839
    %1253 = vmatmul.bf16.gmra.mxu0 %v97
    %v1254 = vpop.f32.mrf.mxu0
    %v1255 = vadd.f32 %v1242, %v1254
    %v1256 = vpop.f32.mrf.mxu0
    %1257 = vdwg.mxu0
    %1258 = vmatpush.bf16.msra.mxu0 %v1071
    %1259 = vmatpush.bf16.msra.mxu0 %v895
    %1260 = vmatpush.bf16.msra.mxu0 %v891
    %1261 = vmatpush.bf16.msra.mxu0 %v887
    %1262 = vmatpush.bf16.msra.mxu0 %v883
    %1263 = vmatpush.bf16.msra.mxu0 %v879
    %1264 = vmatpush.bf16.msra.mxu0 %v875
    %1265 = vmatpush.bf16.msra.mxu0 %v871
    %1266 = vmatmul.bf16.gmra.mxu0 %v1059
    %v1267 = vpop.f32.mrf.mxu0
    %v1268 = vadd.f32 %v1255, %v1267
    %v1269 = vpop.f32.mrf.mxu0
    %1270 = vdwg.mxu0
    %1271 = vmatpush.bf16.msra.mxu0 %v772
    %1272 = vmatpush.bf16.msra.mxu0 %v768
    %1273 = vmatpush.bf16.msra.mxu0 %v764
    %1274 = vmatpush.bf16.msra.mxu0 %v760
    %1275 = vmatpush.bf16.msra.mxu0 %v756
    %1276 = vmatpush.bf16.msra.mxu0 %v752
    %1277 = vmatpush.bf16.msra.mxu0 %v748
    %1278 = vmatpush.bf16.msra.mxu0 %v744
    %1279 = vmatmul.bf16.gmra.mxu0 %v94
    %v1280 = vpop.f32.mrf.mxu0
    %v1281 = vadd.f32 %v262, %v1280
    %v1282 = vpop.f32.mrf.mxu0
    %1283 = vdwg.mxu0
    %1284 = vmatpush.bf16.msra.mxu0 %v804
    %1285 = vmatpush.bf16.msra.mxu0 %v800
    %1286 = vmatpush.bf16.msra.mxu0 %v796
    %1287 = vmatpush.bf16.msra.mxu0 %v792
    %1288 = vmatpush.bf16.msra.mxu0 %v788
    %1289 = vmatpush.bf16.msra.mxu0 %v784
    %1290 = vmatpush.bf16.msra.mxu0 %v780
    %1291 = vmatpush.bf16.msra.mxu0 %v776
    %1292 = vmatmul.bf16.gmra.mxu0 %v95
    %v1293 = vpop.f32.mrf.mxu0
    %v1294 = vadd.f32 %v1281, %v1293
    %v1295 = vpop.f32.mrf.mxu0
    %1296 = vdwg.mxu0
    %1297 = vmatpush.bf16.msra.mxu0 %v836
    %1298 = vmatpush.bf16.msra.mxu0 %v832
    %1299 = vmatpush.bf16.msra.mxu0 %v828
    %1300 = vmatpush.bf16.msra.mxu0 %v824
    %1301 = vmatpush.bf16.msra.mxu0 %v820
    %1302 = vmatpush.bf16.msra.mxu0 %v816
    %1303 = vmatpush.bf16.msra.mxu0 %v812
    %1304 = vmatpush.bf16.msra.mxu0 %v808
    %1305 = vmatmul.bf16.gmra.mxu0 %v96
    %v1306 = vpop.f32.mrf.mxu0
    %v1307 = vadd.f32 %v1294, %v1306
    %v1308 = vpop.f32.mrf.mxu0
    %1309 = vdwg.mxu0
    %1310 = vmatpush.bf16.msra.mxu0 %v868
    %1311 = vmatpush.bf16.msra.mxu0 %v864
    %1312 = vmatpush.bf16.msra.mxu0 %v860
    %1313 = vmatpush.bf16.msra.mxu0 %v856
    %1314 = vmatpush.bf16.msra.mxu0 %v852
    %1315 = vmatpush.bf16.msra.mxu0 %v848
    %1316 = vmatpush.bf16.msra.mxu0 %v844
    %1317 = vmatpush.bf16.msra.mxu0 %v840
    %1318 = vmatmul.bf16.gmra.mxu0 %v97
    %v1319 = vpop.f32.mrf.mxu0
    %v1320 = vadd.f32 %v1307, %v1319
    %v1321 = vpop.f32.mrf.mxu0
    %1322 = vdwg.mxu0
    %1323 = vmatpush.bf16.msra.mxu0 %v1074
    %1324 = vmatpush.bf16.msra.mxu0 %v896
    %1325 = vmatpush.bf16.msra.mxu0 %v892
    %1326 = vmatpush.bf16.msra.mxu0 %v888
    %1327 = vmatpush.bf16.msra.mxu0 %v884
    %1328 = vmatpush.bf16.msra.mxu0 %v880
    %1329 = vmatpush.bf16.msra.mxu0 %v876
    %1330 = vmatpush.bf16.msra.mxu0 %v872
    %1331 = vmatmul.bf16.gmra.mxu0 %v1059
    %v1332 = vpop.f32.mrf.mxu0
    %v1333 = vadd.f32 %v1320, %v1332
    %v1334 = vpop.f32.mrf.mxu0
    %1335 = vdwg.mxu0
    %v1336 = vpack.c.bf16 %v1138, %v1138
    %v1337 = vpack.c.bf16 %v1203, %v1203
    %v1338 = vpack.c.bf16 %v1268, %v1268
    %v1339 = vpack.c.bf16 %v1333, %v1333
    %v1340 = vld [vmem:[#allocation5] sm:$0xf]
    %v1341 = vld [vmem:[#allocation5 + $0x4] sm:$0xf]
    %v1342 = vld [vmem:[#allocation5 + $0x8] sm:$0xf]
    %v1343 = vld [vmem:[#allocation5 + $0xc] sm:$0xf]
    %v1344 = vld [vmem:[#allocation5 + $0x10] sm:$0xf]
    %v1345 = vld [vmem:[#allocation5 + $0x14] sm:$0xf]
    %v1346 = vld [vmem:[#allocation5 + $0x18] sm:$0xf]
    %v1347 = vld [vmem:[#allocation5 + $0x1c] sm:$0xf]
    %v1348 = vld [vmem:[#allocation5 + $0x20] sm:$0xf]
    %v1349 = vld [vmem:[#allocation5 + $0x24] sm:$0xf]
    %v1350 = vld [vmem:[#allocation5 + $0x28] sm:$0xf]
    %v1351 = vld [vmem:[#allocation5 + $0x2c] sm:$0xf]
    %v1352 = vld [vmem:[#allocation5 + $0x30] sm:$0xf]
    %v1353 = vld [vmem:[#allocation5 + $0x34] sm:$0xf]
    %v1354 = vld [vmem:[#allocation5 + $0x38] sm:$0xf]
    %v1355 = vld [vmem:[#allocation5 + $0x3c] sm:$0xf]
    %v1356 = vld [vmem:[#allocation5 + $0x40] sm:$0xf]
    %v1357 = vld [vmem:[#allocation5 + $0x44] sm:$0xf]
    %v1358 = vld [vmem:[#allocation5 + $0x48] sm:$0xf]
    %v1359 = vld [vmem:[#allocation5 + $0x4c] sm:$0xf]
    %v1360 = vld [vmem:[#allocation5 + $0x50] sm:$0xf]
    %v1361 = vld [vmem:[#allocation5 + $0x54] sm:$0xf]
    %v1362 = vld [vmem:[#allocation5 + $0x58] sm:$0xf]
    %v1363 = vld [vmem:[#allocation5 + $0x5c] sm:$0xf]
    %v1364 = vld [vmem:[#allocation5 + $0x60] sm:$0xf]
    %v1365 = vld [vmem:[#allocation5 + $0x64] sm:$0xf]
    %v1366 = vld [vmem:[#allocation5 + $0x68] sm:$0xf]
    %v1367 = vld [vmem:[#allocation5 + $0x6c] sm:$0xf]
    %v1368 = vld [vmem:[#allocation5 + $0x70] sm:$0xf]
    %v1369 = vld [vmem:[#allocation5 + $0x74] sm:$0xf]
    %v1370 = vld [vmem:[#allocation5 + $0x78] sm:$0xf]
    %v1371 = vld [vmem:[#allocation5 + $0x7c] sm:$0xf]
    %v1372 = vld [vmem:[#allocation5 + $0x80] sm:$0xf]
    %v1373 = vld [vmem:[#allocation5 + $0x84] sm:$0xf]
    %v1374 = vld [vmem:[#allocation5 + $0x88] sm:$0xf]
    %v1375 = vld [vmem:[#allocation5 + $0x8c] sm:$0xf]
    %v1376 = vld [vmem:[#allocation5 + $0x90] sm:$0xf]
    %v1377 = vld [vmem:[#allocation5 + $0x94] sm:$0xf]
    %v1378 = vld [vmem:[#allocation5 + $0x98] sm:$0xf]
    %v1379 = vld [vmem:[#allocation5 + $0x9c] sm:$0xf]
    %v1380 = vld [vmem:[#allocation5 + $0xa0] sm:$0xf]
    %v1381 = vld [vmem:[#allocation5 + $0xa4] sm:$0xf]
    %v1382 = vld [vmem:[#allocation5 + $0xa8] sm:$0xf]
    %v1383 = vld [vmem:[#allocation5 + $0xac] sm:$0xf]
    %v1384 = vld [vmem:[#allocation5 + $0xb0] sm:$0xf]
    %v1385 = vld [vmem:[#allocation5 + $0xb4] sm:$0xf]
    %v1386 = vld [vmem:[#allocation5 + $0xb8] sm:$0xf]
    %v1387 = vld [vmem:[#allocation5 + $0xbc] sm:$0xf]
    %v1388 = vld [vmem:[#allocation5 + $0xc0] sm:$0xf]
    %v1389 = vld [vmem:[#allocation5 + $0xc4] sm:$0xf]
    %v1390 = vld [vmem:[#allocation5 + $0xc8] sm:$0xf]
    %v1391 = vld [vmem:[#allocation5 + $0xcc] sm:$0xf]
    %v1392 = vld [vmem:[#allocation5 + $0xd0] sm:$0xf]
    %v1393 = vld [vmem:[#allocation5 + $0xd4] sm:$0xf]
    %v1394 = vld [vmem:[#allocation5 + $0xd8] sm:$0xf]
    %v1395 = vld [vmem:[#allocation5 + $0xdc] sm:$0xf]
    %v1396 = vld [vmem:[#allocation5 + $0xe0] sm:$0xf]
    %v1397 = vld [vmem:[#allocation5 + $0xe4] sm:$0xf]
    %v1398 = vld [vmem:[#allocation5 + $0xe8] sm:$0xf]
    %v1399 = vld [vmem:[#allocation5 + $0xec] sm:$0xf]
    %v1400 = vld [vmem:[#allocation5 + $0xf0] sm:$0xf]
    %v1401 = vld [vmem:[#allocation5 + $0xf4] sm:$0xf]
    %v1402 = vld [vmem:[#allocation5 + $0xf8] sm:$0xf]
    %v1403 = vld [vmem:[#allocation5 + $0xfc] sm:$0xf]
    %v1404 = vld [vmem:[%s4] sm:$0x1]
    %v1406 = vperm.slane %v1404, 0
    %v1472 = vunpack.c.l.b16 %v1340
    %v1473 = vunpack.c.l.b16 %v1341
    %v1474 = vunpack.c.l.b16 %v1342
    %v1475 = vunpack.c.l.b16 %v1343
    %v1476 = vunpack.c.l.b16 %v1344
    %v1477 = vunpack.c.l.b16 %v1345
    %v1478 = vunpack.c.l.b16 %v1346
    %v1479 = vunpack.c.l.b16 %v1347
    %v1480 = vunpack.c.l.b16 %v1348
    %v1481 = vunpack.c.l.b16 %v1349
    %v1482 = vunpack.c.l.b16 %v1350
    %v1483 = vunpack.c.l.b16 %v1351
    %v1484 = vunpack.c.l.b16 %v1352
    %v1485 = vunpack.c.l.b16 %v1353
    %v1486 = vunpack.c.l.b16 %v1354
    %v1487 = vunpack.c.l.b16 %v1355
    %v1488 = vunpack.c.l.b16 %v1356
    %v1489 = vunpack.c.l.b16 %v1357
    %v1490 = vunpack.c.l.b16 %v1358
    %v1491 = vunpack.c.l.b16 %v1359
    %v1492 = vunpack.c.l.b16 %v1360
    %v1493 = vunpack.c.l.b16 %v1361
    %v1494 = vunpack.c.l.b16 %v1362
    %v1495 = vunpack.c.l.b16 %v1363
    %v1496 = vunpack.c.l.b16 %v1364
    %v1497 = vunpack.c.l.b16 %v1365
    %v1498 = vunpack.c.l.b16 %v1366
    %v1499 = vunpack.c.l.b16 %v1367
    %v1500 = vunpack.c.l.b16 %v1368
    %v1501 = vunpack.c.l.b16 %v1369
    %v1502 = vunpack.c.l.b16 %v1370
    %v1503 = vunpack.c.l.b16 %v1371
    %v1504 = vunpack.c.l.b16 %v1372
    %v1505 = vunpack.c.l.b16 %v1373
    %v1506 = vunpack.c.l.b16 %v1374
    %v1507 = vunpack.c.l.b16 %v1375
    %v1508 = vunpack.c.l.b16 %v1376
    %v1509 = vunpack.c.l.b16 %v1377
    %v1510 = vunpack.c.l.b16 %v1378
    %v1511 = vunpack.c.l.b16 %v1379
    %v1512 = vunpack.c.l.b16 %v1380
    %v1513 = vunpack.c.l.b16 %v1381
    %v1514 = vunpack.c.l.b16 %v1382
    %v1515 = vunpack.c.l.b16 %v1383
    %v1516 = vunpack.c.l.b16 %v1384
    %v1517 = vunpack.c.l.b16 %v1385
    %v1518 = vunpack.c.l.b16 %v1386
    %v1519 = vunpack.c.l.b16 %v1387
    %v1520 = vunpack.c.l.b16 %v1388
    %v1521 = vunpack.c.l.b16 %v1389
    %v1522 = vunpack.c.l.b16 %v1390
    %v1523 = vunpack.c.l.b16 %v1391
    %v1524 = vunpack.c.l.b16 %v1392
    %v1525 = vunpack.c.l.b16 %v1393
    %v1526 = vunpack.c.l.b16 %v1394
    %v1527 = vunpack.c.l.b16 %v1395
    %v1528 = vunpack.c.l.b16 %v1396
    %v1529 = vunpack.c.l.b16 %v1397
    %v1530 = vunpack.c.l.b16 %v1398
    %v1531 = vunpack.c.l.b16 %v1399
    %v1532 = vunpack.c.l.b16 %v1400
    %v1533 = vunpack.c.l.b16 %v1401
    %v1534 = vunpack.c.l.b16 %v1402
    %v1535 = vunpack.c.l.b16 %v1403
    %v1536 = vpack.c.b16 %v1473, %v1472
    %v1537 = vpack.c.b16 %v1475, %v1474
    %v1538 = vpack.c.b16 %v1477, %v1476
    %v1539 = vpack.c.b16 %v1479, %v1478
    %v1540 = vpack.c.b16 %v1481, %v1480
    %v1541 = vpack.c.b16 %v1483, %v1482
    %v1542 = vpack.c.b16 %v1485, %v1484
    %v1543 = vpack.c.b16 %v1487, %v1486
    %v1544 = vpack.c.b16 %v1489, %v1488
    %v1545 = vpack.c.b16 %v1491, %v1490
    %v1546 = vpack.c.b16 %v1493, %v1492
    %v1547 = vpack.c.b16 %v1495, %v1494
    %v1548 = vpack.c.b16 %v1497, %v1496
    %v1549 = vpack.c.b16 %v1499, %v1498
    %v1550 = vpack.c.b16 %v1501, %v1500
    %v1551 = vpack.c.b16 %v1503, %v1502
    %v1552 = vpack.c.b16 %v1505, %v1504
    %v1553 = vpack.c.b16 %v1507, %v1506
    %v1554 = vpack.c.b16 %v1509, %v1508
    %v1555 = vpack.c.b16 %v1511, %v1510
    %v1556 = vpack.c.b16 %v1513, %v1512
    %v1557 = vpack.c.b16 %v1515, %v1514
    %v1558 = vpack.c.b16 %v1517, %v1516
    %v1559 = vpack.c.b16 %v1519, %v1518
    %v1560 = vpack.c.b16 %v1521, %v1520
    %v1561 = vpack.c.b16 %v1523, %v1522
    %v1562 = vpack.c.b16 %v1525, %v1524
    %v1563 = vpack.c.b16 %v1527, %v1526
    %v1564 = vpack.c.b16 %v1529, %v1528
    %v1565 = vpack.c.b16 %v1531, %v1530
    %v1566 = vpack.c.b16 %v1533, %v1532
    %v1567 = vpack.c.b16 %v1535, %v1534
    %1600 = vmatpush.bf16.msra.mxu0 %v1543
    %1601 = vmatpush.bf16.msra.mxu0 %v1542
    %1602 = vmatpush.bf16.msra.mxu0 %v1541
    %1603 = vmatpush.bf16.msra.mxu0 %v1540
    %1604 = vmatpush.bf16.msra.mxu0 %v1539
    %1605 = vmatpush.bf16.msra.mxu0 %v1538
    %1606 = vmatpush.bf16.msra.mxu0 %v1537
    %1607 = vmatpush.bf16.msra.mxu0 %v1536
    %1608 = vmatmul.bf16.gmra.mxu0 %v1336
    %v1609 = vpop.f32.mrf.mxu0
    %v1610 = vadd.f32 %v1406, %v1609
    %v1611 = vpop.f32.mrf.mxu0
    %1612 = vdwg.mxu0
    %1613 = vmatpush.bf16.msra.mxu0 %v1551
    %1614 = vmatpush.bf16.msra.mxu0 %v1550
    %1615 = vmatpush.bf16.msra.mxu0 %v1549
    %1616 = vmatpush.bf16.msra.mxu0 %v1548
    %1617 = vmatpush.bf16.msra.mxu0 %v1547
    %1618 = vmatpush.bf16.msra.mxu0 %v1546
    %1619 = vmatpush.bf16.msra.mxu0 %v1545
    %1620 = vmatpush.bf16.msra.mxu0 %v1544
    %1621 = vmatmul.bf16.gmra.mxu0 %v1337
    %v1622 = vpop.f32.mrf.mxu0
    %v1623 = vadd.f32 %v1610, %v1622
    %v1624 = vpop.f32.mrf.mxu0
    %1625 = vdwg.mxu0
    %1626 = vmatpush.bf16.msra.mxu0 %v1559
    %1627 = vmatpush.bf16.msra.mxu0 %v1558
    %1628 = vmatpush.bf16.msra.mxu0 %v1557
    %1629 = vmatpush.bf16.msra.mxu0 %v1556
    %1630 = vmatpush.bf16.msra.mxu0 %v1555
    %1631 = vmatpush.bf16.msra.mxu0 %v1554
    %1632 = vmatpush.bf16.msra.mxu0 %v1553
    %1633 = vmatpush.bf16.msra.mxu0 %v1552
    %1634 = vmatmul.bf16.gmra.mxu0 %v1338
    %v1635 = vpop.f32.mrf.mxu0
    %v1636 = vadd.f32 %v1623, %v1635
    %v1637 = vpop.f32.mrf.mxu0
    %1638 = vdwg.mxu0
    %1639 = vmatpush.bf16.msra.mxu0 %v1567
    %1640 = vmatpush.bf16.msra.mxu0 %v1566
    %1641 = vmatpush.bf16.msra.mxu0 %v1565
    %1642 = vmatpush.bf16.msra.mxu0 %v1564
    %1643 = vmatpush.bf16.msra.mxu0 %v1563
    %1644 = vmatpush.bf16.msra.mxu0 %v1562
    %1645 = vmatpush.bf16.msra.mxu0 %v1561
    %1646 = vmatpush.bf16.msra.mxu0 %v1560
    %1647 = vmatmul.bf16.gmra.mxu0 %v1339
    %v1648 = vpop.f32.mrf.mxu0
    %v1649 = vadd.f32 %v1636, %v1648
    %v1650 = vpop.f32.mrf.mxu0
    %1651 = vdwg.mxu0
    %1652 = vst [vmem:[#allocation7] sm:$0xff] %v1649
    // Predicated region
    $region30: #{base_fcn_high.1} parent=1 // pred_check
      _
    $region31: #{base_fcn_high.1} parent=1 // pred_check_branch
      %1654 = sbr.rel (0) target = $region33
    $region32: #{base_fcn_high.1} parent=1 // pred_region
      %1656 = vsyncadd [#allocation4], 96
      %s1657 = sshll.u32 [#allocation7], 4
      %s1658 = int_to_ptr.vmem [resolvable:$true] %s1657
      %s1659 = sshll.u32 %s5, 4
      %s1660 = int_to_ptr.hbm [resolvable:$true] %s1659
      %1665 = dma.vmem_to_hbm [thread:$0]  %s1658, 32, %s1660, [#allocation4], 32, 32, 2
    $region33: #{base_fcn_high.1} parent=1 // pred_fallthru
      _
    // Predicated region
    $region34: #{base_fcn_high.1} parent=1 // pred_check
      _
    $region35: #{base_fcn_high.1} parent=1 // pred_check_branch
      %1667 = sbr.rel (0) target = $region37
    $region36: #{base_fcn_high.1} parent=1 // pred_region
      %1669 = dma.done [#allocation4], 128
    $region37: #{base_fcn_high.1} parent=1 // pred_fallthru
      _
    %1670 = vsyncpa [#allocation3], 1
    %1671 = vsyncpa [#allocation6], 1
    %1672 = vsyncpa [#allocation4], 1

</llo_original>
